<compile_context>
chip_gen: v7x
topology: tpu7x:2x2x1
jax: 0.10.0
libtpu: 0.0.40
codegen_flags: <defaults>
</compile_context>

<pallas_src>
import functools

import jax
import jax.numpy as jnp
from jax.experimental import pallas as pl
from jax.experimental.pallas import tpu as pltpu


# ----------------------------------------------------------------------------
# Kernels
# ----------------------------------------------------------------------------
def _concat_pool_kernel(x_ref, o_ref, *, inv_hw, reduce_axis):
    # x_ref block: (TN, C, hw) or (TN, hw, C);  o_ref block: (TN, 2, C)
    x = x_ref[...].astype(jnp.float32)             # f32 accumulation
    mx = jnp.max(x, axis=reduce_axis)              # (TN, C) adaptive max (size=1)
    av = jnp.sum(x, axis=reduce_axis) * inv_hw     # (TN, C) adaptive avg (size=1)
    o_ref[:, 0, :] = mx.astype(o_ref.dtype)
    o_ref[:, 1, :] = av.astype(o_ref.dtype)


def _concat_pool_split_kernel(x_ref, o_ref, mx_acc, sum_acc, *, inv_hw,
                              reduce_axis):
    # Spatial (hw) axis split over grid axis 1.  VMEM accumulators carry the
    # running max / f32 sum; init at k == 0, finalize at the last k.
    k = pl.program_id(1)

    @pl.when(k == 0)
    def _init():
        mx_acc[...] = jnp.full_like(mx_acc, -jnp.inf)
        sum_acc[...] = jnp.zeros_like(sum_acc)

    x = x_ref[...].astype(jnp.float32)             # (1, C, hw_t) or (1, hw_t, C)
    mx_acc[...] = jnp.maximum(mx_acc[...], jnp.max(x, axis=reduce_axis))
    sum_acc[...] = sum_acc[...] + jnp.sum(x, axis=reduce_axis)

    @pl.when(k == pl.num_programs(1) - 1)
    def _finalize():
        o_ref[:, 0, :] = mx_acc[...].astype(o_ref.dtype)
        o_ref[:, 1, :] = (sum_acc[...] * inv_hw).astype(o_ref.dtype)


# ----------------------------------------------------------------------------
# Wrapper helpers
# ----------------------------------------------------------------------------
def _round_up(x, m):
    return ((x + m - 1) // m) * m


def _vmem_capacity_bytes():
    try:
        return int(pltpu.get_tpu_info().vmem_capacity_bytes)
    except Exception:
        return 64 * 1024 * 1024  # conservative default (v7x per-core VMEM)


def _largest_divisor_leq(n, limit):
    best = 1
    for d in range(1, n + 1):
        if n % d == 0 and d <= limit:
            best = d
    return best


def _pick_hw_tile(hw, bytes_per_hw_row, budget, multiple):
    """Largest divisor of hw that is a multiple of `multiple` and fits budget."""
    best = None
    d = multiple
    while d <= hw:
        if hw % d == 0 and d * bytes_per_hw_row <= budget:
            best = d
        d += multiple
    return best


# ----------------------------------------------------------------------------
# Public wrapper
# ----------------------------------------------------------------------------
def adaptive_concat_pool2d(x, *, max_block_bytes=None):
    """x: (N, C, H, W) -> (N, 2*C, 1, 1); channels = [max(C), avg(C)]."""
    N, C, H, W = x.shape
    hw = H * W
    inv_hw = 1.0 / float(hw)
    itemsize = jnp.dtype(x.dtype).itemsize

    vmem_cap = _vmem_capacity_bytes()
    budget = min(16 * 1024 * 1024, vmem_cap // 8)  # per-step input block budget
    if max_block_bytes is not None:
        budget = int(max_block_bytes)

    # --- layout selection: keep the 128-lane (last) axis dense ----------------
    padded_spatial_major = _round_up(C, 8) * _round_up(hw, 128)   # tile (C, hw)
    padded_channels_last = _round_up(hw, 8) * _round_up(C, 128)   # tile (hw, C)
    channels_last = padded_channels_last < padded_spatial_major
    # NOTE: in a full model the producer should emit NHWC directly so this
    # wrapper transpose fuses away at layout assignment.
    if channels_last:
        xf = jnp.transpose(x, (0, 2, 3, 1)).reshape(N, hw, C)     # (N, hw, C)
        reduce_axis = 1
        per_image_bytes = padded_channels_last * itemsize
        hw_multiple = 8                                 # sublane-axis constraint
        bytes_per_hw_row = _round_up(C, 128) * itemsize
    else:
        xf = x.reshape(N, C, hw)                                  # (N, C, hw)
        reduce_axis = 2
        per_image_bytes = padded_spatial_major * itemsize
        hw_multiple = 128                               # lane-axis constraint
        bytes_per_hw_row = _round_up(C, 8) * itemsize

    out_shape = jax.ShapeDtypeStruct((N, 2, C), x.dtype)

    if per_image_bytes <= budget:
        # ------------- whole-image path: batch TN images per grid step -------
        tn_limit = max(1, budget // per_image_bytes)
        if N >= 2:
            # keep >= 2 parallel grid steps so both v7x TensorCores get work
            tn_limit = min(tn_limit, N // 2)
        tn = _largest_divisor_leq(N, tn_limit)
        grid = (N // tn,)
        block = (tn, hw, C) if channels_last else (tn, C, hw)
        in_block_bytes = tn * per_image_bytes

        kernel = functools.partial(_concat_pool_kernel, inv_hw=inv_hw,
                                   reduce_axis=reduce_axis)
        grid_spec = pltpu.PrefetchScalarGridSpec(
            num_scalar_prefetch=0,
            grid=grid,
            in_specs=[pl.BlockSpec(block, lambda n: (n, 0, 0))],
            out_specs=pl.BlockSpec((tn, 2, C), lambda n: (n, 0, 0)),
        )
        dim_sem = ("parallel",)
    else:
        # ------------- huge image: split the spatial (reduction) axis --------
        hw_tile = _pick_hw_tile(hw, bytes_per_hw_row, budget, hw_multiple)
        if hw_tile is None:
            hw_tile = hw  # no clean split available: whole image (may be slow)
        grid = (N, hw // hw_tile)
        if channels_last:
            block = (1, hw_tile, C)
            in_map = lambda n, k: (n, k, 0)
        else:
            block = (1, C, hw_tile)
            in_map = lambda n, k: (n, 0, k)
        in_block_bytes = hw_tile * bytes_per_hw_row

        kernel = functools.partial(_concat_pool_split_kernel, inv_hw=inv_hw,
                                   reduce_axis=reduce_axis)
        grid_spec = pltpu.PrefetchScalarGridSpec(
            num_scalar_prefetch=0,
            grid=grid,
            in_specs=[pl.BlockSpec(block, in_map)],
            out_specs=pl.BlockSpec((1, 2, C), lambda n, k: (n, 0, 0)),
            scratch_shapes=[pltpu.VMEM((1, C), jnp.float32),   # running max
                            pltpu.VMEM((1, C), jnp.float32)],  # running sum
        )
        dim_sem = ("parallel", "arbitrary")

    # Generation-aware VMEM limit: double-buffered in/out blocks must fit, and
    # v5e's 16 MiB scoped default must be raised to allow the big-tile config.
    out_block_bytes = block[0] * 8 * _round_up(C, 128) * itemsize
    needed = 2 * in_block_bytes + 2 * out_block_bytes + (1 << 20)
    vmem_limit = int(min(max(vmem_cap // 2, needed), int(0.9 * vmem_cap)))

    out = pl.pallas_call(
        kernel,
        out_shape=out_shape,
        grid_spec=grid_spec,
        compiler_params=pltpu.CompilerParams(
            dimension_semantics=dim_sem,
            vmem_limit_bytes=vmem_limit),
    )(xf)

    # (N, 2, C) -> (N, 2*C, 1, 1): row-major flatten keeps [max(C), avg(C)]
    # order, exactly matching torch.cat([max, avg], dim=1).
    return out.reshape(N, 2 * C, 1, 1)


# ----------------------------------------------------------------------------
# Self-test
# ----------------------------------------------------------------------------
if __name__ == "__main__":
    def reference(x):
        n, c, _, _ = x.shape
        xf32 = x.astype(jnp.float32)
        mx = jnp.max(xf32, axis=(2, 3))
        av = jnp.mean(xf32, axis=(2, 3))
        return jnp.concatenate([mx, av], axis=1).astype(x.dtype).reshape(
            n, 2 * c, 1, 1)

    key = jax.random.PRNGKey(0)
    tests = [
        # (shape,              dtype,         max_block_bytes, tol)
        ((2, 4, 16, 16),       jnp.float32,   None,            1e-5),  # spatial-major
        ((2, 256, 7, 7),       jnp.float32,   None,            1e-5),  # channels-last
        ((8, 8, 8, 8),         jnp.float32,   None,            1e-5),  # TN > 1 batching
        ((1, 128, 8, 8),       jnp.float32,   16 * 1024,       1e-5),  # forced hw split
        ((2, 128, 7, 7),       jnp.bfloat16,  None,            1e-2),  # f32 accumulation
    ]
    for i, (shape, dtype, mbb, tol) in enumerate(tests):
        key, sub = jax.random.split(key)
        x = jax.random.normal(sub, shape, dtype=jnp.float32).astype(dtype)
        out = jax.block_until_ready(adaptive_concat_pool2d(x, max_block_bytes=mbb))
        ref = reference(x)
        assert out.shape == ref.shape, (i, out.shape, ref.shape)
        assert jnp.allclose(out.astype(jnp.float32), ref.astype(jnp.float32),
                            atol=tol, rtol=tol), f"mismatch vs reference in test {i}"

    print("KERNEL_OK")
</pallas_src>

<mosaic_0001>
module attributes {stable_mosaic.version = 11 : i64} {
  func.func @_concat_pool_kernel(%arg0: i32, %arg1: memref<1x4x256xf32, #tpu.memory_space<vmem>>, %arg2: memref<1x2x4xf32, #tpu.memory_space<vmem>>) attributes {dimension_semantics = [#tpu.dimension_semantics<parallel>], iteration_bounds = array<i64: 2>, scalar_prefetch = 0 : i64, scratch_operands = 0 : i64, tpu.core_type = #tpu.core_type<tc>, window_params = [{transform_indices = @transform_0, window_bounds = array<i64: 1, 4, 256>}, {transform_indices = @transform_1, window_bounds = array<i64: 1, 2, 4>}]} {
    %c0 = arith.constant 0 : index
    %c0_0 = arith.constant 0 : index
    %c0_1 = arith.constant 0 : index
    %0 = vector.load %arg1[%c0, %c0_0, %c0_1] : memref<1x4x256xf32, #tpu.memory_space<vmem>>, vector<1x4x256xf32>
    %cst = arith.constant dense<0xFF800000> : vector<1x4xf32>
    %1 = vector.multi_reduction <maximumf>, %0, %cst [2] : vector<1x4x256xf32> to vector<1x4xf32>
    %cst_2 = arith.constant dense<0.000000e+00> : vector<1x4xf32>
    %2 = vector.multi_reduction <add>, %0, %cst_2 [2] : vector<1x4x256xf32> to vector<1x4xf32>
    %cst_3 = arith.constant 3.906250e-03 : f32
    %3 = vector.broadcast %cst_3 : f32 to vector<1x4xf32>
    %4 = arith.mulf %2, %3 : vector<1x4xf32>
    %c0_4 = arith.constant 0 : index
    %c0_5 = arith.constant 0 : index
    %c0_6 = arith.constant 0 : index
    %5 = vector.load %arg2[%c0_4, %c0_5, %c0_6] : memref<1x2x4xf32, #tpu.memory_space<vmem>>, vector<1x1x4xf32>
    %6 = vector.shape_cast %5 : vector<1x1x4xf32> to vector<1x4xf32>
    %7 = vector.shape_cast %1 : vector<1x4xf32> to vector<1x1x4xf32>
    tpu.vector_store %arg2[%c0_4, %c0_5, %c0_6], %7 {strides = array<i32>} : memref<1x2x4xf32, #tpu.memory_space<vmem>>, vector<1x1x4xf32>,
    %c0_7 = arith.constant 0 : index
    %c1 = arith.constant 1 : index
    %c0_8 = arith.constant 0 : index
    %8 = vector.load %arg2[%c0_7, %c1, %c0_8] : memref<1x2x4xf32, #tpu.memory_space<vmem>>, vector<1x1x4xf32>
    %9 = vector.shape_cast %8 : vector<1x1x4xf32> to vector<1x4xf32>
    %10 = vector.shape_cast %4 : vector<1x4xf32> to vector<1x1x4xf32>
    tpu.vector_store %arg2[%c0_7, %c1, %c0_8], %10 {strides = array<i32>} : memref<1x2x4xf32, #tpu.memory_space<vmem>>, vector<1x1x4xf32>,
    return
  }
  func.func @transform_0(%arg0: i32) -> (i32, i32, i32) {
    %c0_i32 = arith.constant 0 : i32
    %c0_i32_0 = arith.constant 0 : i32
    %c0_i32_1 = arith.constant 0 : i32
    return %arg0, %c0_i32, %c0_i32_0 : i32, i32, i32
  }
  func.func @transform_1(%arg0: i32) -> (i32, i32, i32) {
    %c0_i32 = arith.constant 0 : i32
    %c0_i32_0 = arith.constant 0 : i32
    %c0_i32_1 = arith.constant 0 : i32
    return %arg0, %c0_i32, %c0_i32_0 : i32, i32, i32
  }
}

</mosaic_0001>

<llo_original>
// kernel: tpu_custom_call.1
$region0: #{tpu_custom_call.1}
  #allocation0 [shape = 'u32[]', space=smem, size = 0x4, offset = 0x4, fixed_abs, tag = 'smem constant byte address 0x4 - core index']
  #allocation1 [shape = 'u32[144,128]{1,0:T(1,128)}', space=vmem, size = 0x12000, scoped, tag = 'internal scratch']
  %s0 = inlined_call_operand.hbm [shape: f32[2,4,256], index: 0, kind: input, shape index: {}]
  %s1 = inlined_call_operand.hbm [shape: f32[2,2,4], index: 1, kind: output, shape index: {}]
  %s2 = sld [smem:[#allocation0]]
  $region41: #{tpu_custom_call.1} parent=0
    _
  %s4 = ssub.s32 1, %s2
  %s5 = scalar_select 0, %s4, %s2
  $region1: #{tpu_custom_call.1} parent=0
    #allocation2 [shape = 'u8[8192]{0}', space=vmem, size = 0x2000, scoped, tag = 'input window, operand 0']
    #allocation3 [shape = 's32[2]{0}', space=sflag, size = 0x8, scoped, tag = 'scoped memory for tpu_custom_call.1']
    #allocation4 [shape = 's32[2]{0}', space=sflag, size = 0x8, scoped, tag = 'scoped memory for tpu_custom_call.1']
    #allocation5 [shape = 'u8[2048]{0}', space=vmem, size = 0x800, scoped, tag = 'output window, operand 0']
    %6 = vsyncpa [#allocation3], 0
    %s7 = scalar_lea.sflag [#allocation3], 1
    %8 = vsyncpa %s7, 0
    %9 = vsyncpa [#allocation4], 0
    %s10 = scalar_lea.sflag [#allocation4], 1
    %11 = vsyncpa %s10, 0
    loop: start=0, step=1, limit=4
    $region2: #{tpu_custom_call.1} parent=1 // loop_pre_header
      _
    $region3: #{tpu_custom_call.1} parent=1 // loop_header
      %s13 = sphi 0, %s17
      %p14 = scmp.ge.s32.totalorder %s13, 4
      %s23 = sphi 0, %s25
      %s26 = sphi 0, %s23
      %s27 = sphi 0, %s26
      %s43 = sphi 0, %s27
      %s49 = sphi 0, %s51
      %s52 = sphi 0, %s49
      %s53 = sphi 0, %s52
      %s69 = sphi 0, %s53
    $region4: #{tpu_custom_call.1} parent=1 // loop_header_branch
      %16 = sbr.rel (%p14) target = $region8
    $region5: #{tpu_custom_call.1} parent=1 // loop_body
      %s18 = ssub.s32 %s13, 1
      %s19 = ssub.s32 %s13, 2
      %s20 = sadd.s32 %s13, 1
      %s21 = ssub.s32 %s13, %s20
      %p22 = scmp.eq.s32.totalorder %s21, 0
      %s24 = sadd.s32 %s23, 1
      %s25 = scalar_select %p22, %s23, %s24
      %p28 = pneg %p22
      %p29 = scmp.eq.s32.totalorder %s13, 1
      %p30 = por %p28, %p29
      %p31 = scmp.ne.s32.totalorder %s23, %s26
      %p32 = scmp.eq.s32.totalorder %s13, 0
      %p33 = por %p31, %p32
      %p34 = scmp.ne.s32.totalorder %s23, %s26
      %p35 = scmp.eq.s32.totalorder %s18, 1
      %p36 = por %p34, %p35
      %p37 = scmp.ne.s32.totalorder %s26, %s27
      %p38 = scmp.eq.s32.totalorder %s18, 0
      %p39 = por %p37, %p38
      %p40 = scmp.ne.s32.totalorder %s26, %s27
      %p41 = scmp.eq.s32.totalorder %s19, 1
      %p42 = por %p40, %p41
      %p44 = scmp.ne.s32.totalorder %s27, %s43
      %p45 = scmp.eq.s32.totalorder %s19, 0
      %p46 = por %p44, %p45
      %s47 = ssub.s32 %s13, %s20
      %p48 = scmp.eq.s32.totalorder %s47, 0
      %s50 = sadd.s32 %s49, 1
      %s51 = scalar_select %p48, %s49, %s50
      %p54 = pneg %p48
      %p55 = scmp.eq.s32.totalorder %s13, 1
      %p56 = por %p54, %p55
      %p57 = scmp.ne.s32.totalorder %s49, %s52
      %p58 = scmp.eq.s32.totalorder %s13, 0
      %p59 = por %p57, %p58
      %p60 = scmp.ne.s32.totalorder %s49, %s52
      %p61 = scmp.eq.s32.totalorder %s18, 1
      %p62 = por %p60, %p61
      %p63 = scmp.ne.s32.totalorder %s52, %s53
      %p64 = scmp.eq.s32.totalorder %s18, 0
      %p65 = por %p63, %p64
      %p66 = scmp.ne.s32.totalorder %s52, %s53
      %p67 = scmp.eq.s32.totalorder %s19, 1
      %p68 = por %p66, %p67
      %p70 = scmp.ne.s32.totalorder %s53, %s69
      %p71 = scmp.eq.s32.totalorder %s19, 0
      %p72 = por %p70, %p71
      %p73 = scmp.le.s32.totalorder 1, %s13
      %p74 = scmp.lt.s32.totalorder %s13, 3
      %p75 = pnand %p73, %p74
      %p76 = pneg %p75
      // Predicated region
      $region9: #{tpu_custom_call.1} parent=5 // pred_check
        _
      $region10: #{tpu_custom_call.1} parent=5 // pred_check_branch
        %78 = sbr.rel (%p75) target = $region12
      $region11: #{tpu_custom_call.1} parent=5 // pred_region
        %s79 = ssub.s32 %s13, 1
      $region12: #{tpu_custom_call.1} parent=5 // pred_fallthru
        _
      %p80 = scmp.lt.s32.totalorder %s13, 2
      // Predicated region
      $region13: #{tpu_custom_call.1} parent=5 // pred_check
        %p81 = pneg %p80
      $region14: #{tpu_custom_call.1} parent=5 // pred_check_branch
        %83 = sbr.rel (%p81) target = $region16
      $region15: #{tpu_custom_call.1} parent=5 // pred_region
        // Predicated region
        $region17: #{tpu_custom_call.1} parent=15 // pred_check
          %p84 = pneg %p33
        $region18: #{tpu_custom_call.1} parent=15 // pred_check_branch
          %86 = sbr.rel (%p84) target = $region20
        $region19: #{tpu_custom_call.1} parent=15 // pred_region
          %s87 = sand.u32 %s23, 1
          %s88 = scalar_lea.sflag [#allocation3], %s87
          %s89 = sand.u32 %s23, 1
          %s90 = smul.addr %s89, 8
          %s91 = scalar_lea.vmem [#allocation2], %s90
          %s93 = ssub.s32 128, 128
          %94 = vsyncadd %s88, %s93
          %s95 = smul.addr %s13, 2
          %s96 = smul.addr %s95, 64
          %s97 = scalar_lea.hbm %s0, %s96
          %s99 = sshll.u32 %s91, 4
          %s100 = int_to_ptr.vmem [resolvable:$true] %s99
          %102 = dma.hbm_to_vmem [thread:$0]  %s97, 128, %s100, %s88
        $region20: #{tpu_custom_call.1} parent=15 // pred_fallthru
          _
      $region16: #{tpu_custom_call.1} parent=5 // pred_fallthru
        _
      %p103 = scmp.le.s32.totalorder 1, %s13
      %p104 = scmp.lt.s32.totalorder %s13, 3
      %p105 = pnand %p103, %p104
      %p106 = pneg %p105
      // Predicated region
      $region21: #{tpu_custom_call.1} parent=5 // pred_check
        _
      $region22: #{tpu_custom_call.1} parent=5 // pred_check_branch
        %108 = sbr.rel (%p105) target = $region24
      $region23: #{tpu_custom_call.1} parent=5 // pred_region
        %s109 = ssub.s32 %s13, 1
        %s110 = sand.u32 %s26, 1
        %s111 = scalar_lea.sflag [#allocation3], %s110
        %s112 = sand.u32 %s26, 1
        %s113 = smul.addr %s112, 8
        %s114 = scalar_lea.vmem [#allocation2], %s113
        // Predicated region
        $region25: #{tpu_custom_call.1} parent=23 // pred_check
          %p115 = pneg %p39
        $region26: #{tpu_custom_call.1} parent=23 // pred_check_branch
          %117 = sbr.rel (%p115) target = $region28
        $region27: #{tpu_custom_call.1} parent=23 // pred_region
          %118 = dma.done %s111, 128
        $region28: #{tpu_custom_call.1} parent=23 // pred_fallthru
          _
        %s119 = sand.u32 %s26, 1
        %s120 = scalar_lea.sflag [#allocation3], %s119
        %s121 = sand.u32 %s26, 1
        %s122 = smul.addr %s121, 8
        %s123 = scalar_lea.vmem [#allocation2], %s122
        %p124 = pneg %p39
        %p125 = pneg %p36
        %p126 = pneg %p65
        %p127 = pneg %p62
        %s128 = sand.u32 %s52, 1
        %s129 = scalar_lea.sflag [#allocation4], %s128
        %s130 = sand.u32 %s52, 1
        %s131 = smul.addr %s130, 2
        %s132 = scalar_lea.vmem [#allocation5], %s131
        %v133 = vld [vmem:[%s114] sm:$0xff]
        %v135 = vcombine.high %v133, %v133
        %vm137 = vcmask 1043456
        %v138 = vsel %vm137, %v133, -inf
        %v139 = vsel %vm137, %v135, -inf
        %v140 = vmax.f32 %v138, %v139
        %141 = vmax.xlane.f32.xlu0 %v140
        %v142 = vpop.xlane.xlu0 %141
        %v143 = vsel %vm137, %v133, 0.0
        %v144 = vsel %vm137, %v135, 0.0
        %v145 = vadd.f32 %v143, %v144
        %146 = vadd.xlane.f32.xlu0 %v145
        %v147 = vpop.xlane.xlu0 %146
        %v148 = vmul.f32 %v147, 0.00390625
        %v150 = vlaneseq
        %v151 = vand.u32 %v150, 127
        %v152 = vlaneseq
        %v153 = vshrl.u32 %v152, 7
        %v154 = vsub.s32 %v151, %v153
        %v155 = vrot.slane %v142, %v154
        %vm157 = vcmask 24576
        %158 = vst.msk [vmem:[%s132] sm:$0x1] %vm157, %v155
        %v160 = vlaneseq
        %v161 = vshrl.u32 %v160, 7
        %v162 = vsub.s32 %v151, %v161
        %v163 = vrot.slane %v148, %v162
        %165 = vst.msk [vmem:[%s132 + $0x1] sm:$0x1] %vm157, %v163
        %s166 = sand.u32 %s52, 1
        %s167 = scalar_lea.sflag [#allocation4], %s166
        %s168 = sand.u32 %s52, 1
        %s169 = smul.addr %s168, 2
        %s170 = scalar_lea.vmem [#allocation5], %s169
        // Predicated region
        $region29: #{tpu_custom_call.1} parent=23 // pred_check
          %p171 = pneg %p62
        $region30: #{tpu_custom_call.1} parent=23 // pred_check_branch
          %173 = sbr.rel (%p171) target = $region32
        $region31: #{tpu_custom_call.1} parent=23 // pred_region
          %s175 = ssub.s32 32, 32
          %176 = vsyncadd %s167, %s175
          %s177 = smul.addr %s18, 32
          %s178 = scalar_lea.hbm %s1, %s177
          %s180 = sshll.u32 %s170, 4
          %s181 = int_to_ptr.vmem [resolvable:$true] %s180
          %183 = dma.vmem_to_hbm [thread:$0]  %s181, 32, %s178, %s167
        $region32: #{tpu_custom_call.1} parent=23 // pred_fallthru
          _
      $region24: #{tpu_custom_call.1} parent=5 // pred_fallthru
        _
      %p184 = scmp.le.s32.totalorder 2, %s13
      // Predicated region
      $region33: #{tpu_custom_call.1} parent=5 // pred_check
        %p185 = pneg %p184
      $region34: #{tpu_custom_call.1} parent=5 // pred_check_branch
        %187 = sbr.rel (%p185) target = $region36
      $region35: #{tpu_custom_call.1} parent=5 // pred_region
        %s188 = ssub.s32 %s13, 2
        // Predicated region
        $region37: #{tpu_custom_call.1} parent=35 // pred_check
          %p189 = pneg %p68
        $region38: #{tpu_custom_call.1} parent=35 // pred_check_branch
          %191 = sbr.rel (%p189) target = $region40
        $region39: #{tpu_custom_call.1} parent=35 // pred_region
          %s192 = sand.u32 %s53, 1
          %s193 = scalar_lea.sflag [#allocation4], %s192
          %s194 = sand.u32 %s53, 1
          %s195 = smul.addr %s194, 2
          %s196 = scalar_lea.vmem [#allocation5], %s195
          %197 = dma.done %s193, 32
        $region40: #{tpu_custom_call.1} parent=35 // pred_fallthru
          _
      $region36: #{tpu_custom_call.1} parent=5 // pred_fallthru
        _
    $region6: #{tpu_custom_call.1} parent=1 // loop_footer
      %s17 = sadd.s32 1, %s13
    $region7: #{tpu_custom_call.1} parent=1 // loop_footer_branch
      %12 = sbr.rel target = $region3
    $region8: #{tpu_custom_call.1} parent=1 // loop_exit
      _
    %198 = vsyncpa [#allocation3], 1
    %s199 = scalar_lea.sflag [#allocation3], 1
    %200 = vsyncpa %s199, 1
    %201 = vsyncpa [#allocation4], 1
    %s202 = scalar_lea.sflag [#allocation4], 1
    %203 = vsyncpa %s202, 1

</llo_original>
